<compile_context>
chip_gen: v7x
topology: tpu7x:2x2x1
jax: 0.10.0
libtpu: 0.0.40
codegen_flags: <defaults>
</compile_context>

<pallas_src>
import functools

import jax
import jax.numpy as jnp
from jax.experimental import pallas as pl
from jax.experimental.pallas import tpu as pltpu

_LANE = 128


def _edge_loss_kernel(a_ref, b_ref, out_ref, *, apply_sigmoid: bool,
                      total: int, tile_rows: int):
    a = a_ref[...].astype(jnp.float32)
    b = b_ref[...].astype(jnp.float32)
    if apply_sigmoid:
        a = jax.nn.sigmoid(a)
        b = jax.nn.sigmoid(b)
    s = a + b

    # Global element index of each entry in this tile -> mask out everything
    # past the true element count (covers lane-remainder pad and Pallas'
    # padded last block; comparisons on garbage never produce NaN edges).
    row_ids = jax.lax.broadcasted_iota(jnp.int32, (tile_rows, _LANE), 0)
    col_ids = jax.lax.broadcasted_iota(jnp.int32, (tile_rows, _LANE), 1)
    base_row = pl.program_id(0) * tile_rows
    idx = (base_row + row_ids) * _LANE + col_ids
    valid = jnp.logical_and(idx < total, s >= 1.0)

    edge = jnp.where(valid, 1.0, 0.0).astype(jnp.float32)
    # Sublane reduce only; cross-lane reduce deferred to the wrapper.
    out_ref[...] = jnp.sum(edge, axis=0, keepdims=True)


def edge_loss(edge_shadmask, edge_noshad, *, apply_sigmoid: bool = True,
              tile_rows: int = 2048):
    assert edge_shadmask.shape == edge_noshad.shape
    total = edge_shadmask.size

    a = edge_shadmask.reshape(-1)
    b = edge_noshad.reshape(-1)

    # Only pad the (tiny, <128 element) lane remainder; padded elements are
    # masked out in-kernel so the pad value is irrelevant.
    rem = (-total) % _LANE
    if rem:
        a = jnp.pad(a, (0, rem))
        b = jnp.pad(b, (0, rem))
    rows = (total + rem) // _LANE
    a2 = a.reshape(rows, _LANE)
    b2 = b.reshape(rows, _LANE)

    # Clamp the tile to the array size (rounded to 16 sublanes so bf16/f32
    # layouts are both happy).
    tr = min(tile_rows, pl.cdiv(rows, 16) * 16)
    num_tiles = pl.cdiv(rows, tr)

    partials = pl.pallas_call(
        functools.partial(_edge_loss_kernel, apply_sigmoid=apply_sigmoid,
                          total=total, tile_rows=tr),
        out_shape=jax.ShapeDtypeStruct((num_tiles, _LANE), jnp.float32),
        grid_spec=pltpu.PrefetchScalarGridSpec(
            num_scalar_prefetch=0,
            grid=(num_tiles,),
            in_specs=[
                pl.BlockSpec((tr, _LANE), lambda i: (i, 0)),
                pl.BlockSpec((tr, _LANE), lambda i: (i, 0)),
            ],
            out_specs=pl.BlockSpec((1, _LANE), lambda i: (i, 0)),
        ),
        compiler_params=pltpu.CompilerParams(
            dimension_semantics=("parallel",)),
    )(a2, b2)

    # Tiny final combine: numerator = #edge, denominator = #non-edge.
    numerator = jnp.sum(partials)
    denominator = jnp.float32(total) - numerator
    return numerator / denominator


def edge_loss_ref(edge_shadmask, edge_noshad, *, apply_sigmoid=True):
    a = edge_shadmask.astype(jnp.float32)
    b = edge_noshad.astype(jnp.float32)
    if apply_sigmoid:
        a = jax.nn.sigmoid(a)
        b = jax.nn.sigmoid(b)
    edge = a + b
    edge = jnp.where(edge >= 1.0, 1.0, 0.0)
    numerator = jnp.sum(edge)
    denominator = jnp.sum(1.0 - edge)
    return numerator / denominator


if __name__ == "__main__":
    key = jax.random.PRNGKey(0)
    k1, k2 = jax.random.split(key)
    # small shapes consistent with an edge-map head: (N, C, H, W)
    edge_shadmask = jax.random.normal(k1, (2, 4, 16, 16), dtype=jnp.float32)
    edge_noshad = jax.random.normal(k2, (2, 4, 16, 16), dtype=jnp.float32)

    loss = edge_loss(edge_shadmask, edge_noshad, apply_sigmoid=True)
    loss = jax.block_until_ready(loss)

    ref = edge_loss_ref(edge_shadmask, edge_noshad, apply_sigmoid=True)
    assert jnp.allclose(loss, ref, atol=1e-5, rtol=1e-5), (loss, ref)

    print("KERNEL_OK")
</pallas_src>

<mosaic_0001>
module attributes {stable_mosaic.version = 11 : i64} {
  func.func @_edge_loss_kernel(%arg0: i32, %arg1: memref<16x128xf32, #tpu.memory_space<vmem>>, %arg2: memref<16x128xf32, #tpu.memory_space<vmem>>, %arg3: memref<1x128xf32, #tpu.memory_space<vmem>>) attributes {dimension_semantics = [#tpu.dimension_semantics<parallel>], iteration_bounds = array<i64: 1>, scalar_prefetch = 0 : i64, scratch_operands = 0 : i64, tpu.core_type = #tpu.core_type<tc>, window_params = [{transform_indices = @transform_0, window_bounds = array<i64: 16, 128>}, {transform_indices = @transform_1, window_bounds = array<i64: 16, 128>}, {transform_indices = @transform_2, window_bounds = array<i64: 1, 128>}]} {
    %c0 = arith.constant 0 : index
    %c0_0 = arith.constant 0 : index
    %0 = vector.load %arg1[%c0, %c0_0] : memref<16x128xf32, #tpu.memory_space<vmem>>, vector<16x128xf32>
    %c0_1 = arith.constant 0 : index
    %c0_2 = arith.constant 0 : index
    %1 = vector.load %arg2[%c0_1, %c0_2] : memref<16x128xf32, #tpu.memory_space<vmem>>, vector<16x128xf32>
    %2 = arith.negf %0 : vector<16x128xf32>
    %3 = math.exp %2 : vector<16x128xf32>
    %cst = arith.constant 1.000000e+00 : f32
    %4 = vector.broadcast %cst : f32 to vector<16x128xf32>
    %5 = arith.addf %4, %3 : vector<16x128xf32>
    %6 = arith.divf %4, %5 : vector<16x128xf32>
    %7 = arith.negf %1 : vector<16x128xf32>
    %8 = math.exp %7 : vector<16x128xf32>
    %cst_3 = arith.constant 1.000000e+00 : f32
    %9 = vector.broadcast %cst_3 : f32 to vector<16x128xf32>
    %10 = arith.addf %9, %8 : vector<16x128xf32>
    %11 = arith.divf %9, %10 : vector<16x128xf32>
    %12 = arith.addf %6, %11 : vector<16x128xf32>
    %13 = tpu.iota {dimensions = array<i32: 0>} : vector<16x128xi32>
    %14 = tpu.iota {dimensions = array<i32: 1>} : vector<16x128xi32>
    %c16_i32 = arith.constant 16 : i32
    %15 = arith.muli %arg0, %c16_i32 : i32
    %16 = vector.broadcast %15 : i32 to vector<16x128xi32>
    %17 = arith.addi %16, %13 : vector<16x128xi32>
    %c128_i32 = arith.constant 128 : i32
    %18 = vector.broadcast %c128_i32 : i32 to vector<16x128xi32>
    %19 = arith.muli %17, %18 : vector<16x128xi32>
    %20 = arith.addi %19, %14 : vector<16x128xi32>
    %c2048_i32 = arith.constant 2048 : i32
    %21 = vector.broadcast %c2048_i32 : i32 to vector<16x128xi32>
    %22 = arith.cmpi slt, %20, %21 : vector<16x128xi32>
    %cst_4 = arith.constant 1.000000e+00 : f32
    %23 = vector.broadcast %cst_4 : f32 to vector<16x128xf32>
    %24 = arith.cmpf oge, %12, %23 : vector<16x128xf32>
    %25 = arith.andi %22, %24 : vector<16x128xi1>
    %cst_5 = arith.constant 1.000000e+00 : f32
    %cst_6 = arith.constant 0.000000e+00 : f32
    %26 = vector.broadcast %cst_5 : f32 to vector<16x128xf32>
    %27 = vector.broadcast %cst_6 : f32 to vector<16x128xf32>
    %28 = arith.select %25, %26, %27 : vector<16x128xi1>, vector<16x128xf32>
    %cst_7 = arith.constant dense<0.000000e+00> : vector<128xf32>
    %29 = vector.multi_reduction <add>, %28, %cst_7 [0] : vector<16x128xf32> to vector<128xf32>
    %30 = vector.shape_cast %29 : vector<128xf32> to vector<1x128xf32>
    %c0_8 = arith.constant 0 : index
    %c0_9 = arith.constant 0 : index
    %31 = vector.load %arg3[%c0_8, %c0_9] : memref<1x128xf32, #tpu.memory_space<vmem>>, vector<1x128xf32>
    tpu.vector_store %arg3[%c0_8, %c0_9], %30 {strides = array<i32>} : memref<1x128xf32, #tpu.memory_space<vmem>>, vector<1x128xf32>,
    return
  }
  func.func @transform_0(%arg0: i32) -> (i32, i32) {
    %c0_i32 = arith.constant 0 : i32
    %c0_i32_0 = arith.constant 0 : i32
    return %arg0, %c0_i32 : i32, i32
  }
  func.func @transform_1(%arg0: i32) -> (i32, i32) {
    %c0_i32 = arith.constant 0 : i32
    %c0_i32_0 = arith.constant 0 : i32
    return %arg0, %c0_i32 : i32, i32
  }
  func.func @transform_2(%arg0: i32) -> (i32, i32) {
    %c0_i32 = arith.constant 0 : i32
    %c0_i32_0 = arith.constant 0 : i32
    return %arg0, %c0_i32 : i32, i32
  }
}

</mosaic_0001>

<llo_original>
// kernel: tpu_custom_call.1
$region0: #{tpu_custom_call.1}
  #allocation0 [shape = 'u32[]', space=smem, size = 0x4, offset = 0x4, fixed_abs, tag = 'smem constant byte address 0x4 - core index']
  #allocation1 [shape = 'u32[144,128]{1,0:T(1,128)}', space=vmem, size = 0x12000, scoped, tag = 'internal scratch']
  %s0 = inlined_call_operand.hbm [shape: f32[16,128], index: 0, kind: input, shape index: {}]
  %s1 = inlined_call_operand.hbm [shape: f32[16,128], index: 1, kind: input, shape index: {}]
  %s2 = inlined_call_operand.hbm [shape: f32[1,128], index: 2, kind: output, shape index: {}]
  %s3 = sld [smem:[#allocation0]]
  $region26: #{tpu_custom_call.1} parent=0
    _
  %s5 = ssub.s32 1, %s3
  %s6 = scalar_select 0, %s5, %s3
  $region1: #{tpu_custom_call.1} parent=0
    #allocation2 [shape = 'u8[8192]{0}', space=vmem, size = 0x2000, scoped, tag = 'input window, operand 0, single buffered']
    #allocation3 [shape = 's32[1]{0}', space=sflag, size = 0x4, scoped, tag = 'scoped memory for tpu_custom_call.1']
    #allocation4 [shape = 's32[1]{0}', space=sflag, size = 0x4, scoped, tag = 'scoped memory for tpu_custom_call.1']
    #allocation5 [shape = 'u8[8192]{0}', space=vmem, size = 0x2000, scoped, tag = 'input window, operand 1, single buffered']
    #allocation6 [shape = 's32[1]{0}', space=sflag, size = 0x4, scoped, tag = 'scoped memory for tpu_custom_call.1']
    #allocation7 [shape = 'u8[512]{0}', space=vmem, size = 0x400, scoped, tag = 'output window, operand 0, single buffered']
    %7 = vsyncpa [#allocation3], 0
    %8 = vsyncpa [#allocation6], 0
    %9 = vsyncpa [#allocation4], 0
    // Predicated region
    $region2: #{tpu_custom_call.1} parent=1 // pred_check
      _
    $region3: #{tpu_custom_call.1} parent=1 // pred_check_branch
      %11 = sbr.rel (0) target = $region5
    $region4: #{tpu_custom_call.1} parent=1 // pred_region
      %s13 = ssub.s32 256, 256
      %14 = vsyncadd [#allocation3], %s13
      %s15 = sshll.u32 [#allocation2], 4
      %s16 = int_to_ptr.vmem [resolvable:$true] %s15
      %21 = dma.hbm_to_vmem [thread:$0]  %s0, 256, %s16, [#allocation3], 128, 128, 8
    $region5: #{tpu_custom_call.1} parent=1 // pred_fallthru
      _
    // Predicated region
    $region6: #{tpu_custom_call.1} parent=1 // pred_check
      _
    $region7: #{tpu_custom_call.1} parent=1 // pred_check_branch
      %23 = sbr.rel (0) target = $region9
    $region8: #{tpu_custom_call.1} parent=1 // pred_region
      %s25 = ssub.s32 256, 256
      %26 = vsyncadd [#allocation6], %s25
      %s27 = sshll.u32 [#allocation5], 4
      %s28 = int_to_ptr.vmem [resolvable:$true] %s27
      %33 = dma.hbm_to_vmem [thread:$0]  %s1, 256, %s28, [#allocation6], 128, 128, 8
    $region9: #{tpu_custom_call.1} parent=1 // pred_fallthru
      _
    // Predicated region
    $region10: #{tpu_custom_call.1} parent=1 // pred_check
      _
    $region11: #{tpu_custom_call.1} parent=1 // pred_check_branch
      %35 = sbr.rel (0) target = $region13
    $region12: #{tpu_custom_call.1} parent=1 // pred_region
      %36 = dma.done [#allocation3], 256
    $region13: #{tpu_custom_call.1} parent=1 // pred_fallthru
      _
    // Predicated region
    $region14: #{tpu_custom_call.1} parent=1 // pred_check
      _
    $region15: #{tpu_custom_call.1} parent=1 // pred_check_branch
      %38 = sbr.rel (0) target = $region17
    $region16: #{tpu_custom_call.1} parent=1 // pred_region
      %39 = dma.done [#allocation6], 256
    $region17: #{tpu_custom_call.1} parent=1 // pred_fallthru
      _
    %v40 = vld [vmem:[#allocation2] sm:$0xff]
    %v41 = vld [vmem:[#allocation2 + $0x8] sm:$0xff]
    %v42 = vld [vmem:[#allocation5] sm:$0xff]
    %v43 = vld [vmem:[#allocation5 + $0x8] sm:$0xff]
    %v44 = vxor.u32 %v40, 2147483648
    %v45 = vxor.u32 %v41, 2147483648
    %v46 = vmul.f32 %v44, 1.442695
    %v47 = vpow.pop %v46
    %v48 = vmul.f32 %v45, 1.442695
    %v49 = vpow.pop %v48
    %v50 = vadd.f32 %v47, 1.0
    %v51 = vadd.f32 %v49, 1.0
    %v52 = vrcp.pop %v50
    %v53 = vmul.f32 1.0, %v52
    %v54 = vrcp.pop %v51
    %v55 = vmul.f32 1.0, %v54
    %v56 = vxor.u32 %v42, 2147483648
    %v57 = vxor.u32 %v43, 2147483648
    %v58 = vmul.f32 %v56, 1.442695
    %v59 = vpow.pop %v58
    %v60 = vmul.f32 %v57, 1.442695
    %v61 = vpow.pop %v60
    %v62 = vadd.f32 %v59, 1.0
    %v63 = vadd.f32 %v61, 1.0
    %v64 = vrcp.pop %v62
    %v65 = vmul.f32 1.0, %v64
    %v66 = vrcp.pop %v63
    %v67 = vmul.f32 1.0, %v66
    %v68 = vadd.f32 %v53, %v65
    %v69 = vadd.f32 %v55, %v67
    %v70 = vlaneseq
    %v71 = vshrl.u32 %v70, 7
    %v72 = vadd.s32 %v71, 8
    %v73 = vlaneseq
    %v74 = vand.u32 %v73, 127
    %s75 = smul.u32 0, 16
    %v76 = vstv %s75
    %v77 = vadd.s32 %v76, %v71
    %v78 = vadd.s32 %v76, %v72
    %v79 = vmul.u32 %v77, 128
    %v80 = vmul.u32 %v78, 128
    %v81 = vadd.s32 %v79, %v74
    %v82 = vadd.s32 %v80, %v74
    %vm83 = vcmp.lt.s32.totalorder %v81, 2048
    %vm84 = vcmp.lt.s32.totalorder %v82, 2048
    %vm85 = vcmp.ge.f32.partialorder %v68, 1.0
    %vm86 = vcmp.ge.f32.partialorder %v69, 1.0
    %vm87 = vmand %vm83, %vm85
    %vm88 = vmand %vm84, %vm86
    %v89 = vsel %vm87, 1.0, 0.0
    %v90 = vsel %vm88, 1.0, 0.0
    %v91 = vadd.f32 %v89, %v90
    %v92 = vrot.slane %v91, 4
    %v93 = vadd.f32 %v91, %v92
    %v94 = vrot.slane %v93, 2
    %v95 = vadd.f32 %v93, %v94
    %v96 = vrot.slane %v95, 1
    %v97 = vadd.f32 %v95, %v96
    %98 = vst [vmem:[#allocation7] sm:$0x1] %v97
    // Predicated region
    $region18: #{tpu_custom_call.1} parent=1 // pred_check
      _
    $region19: #{tpu_custom_call.1} parent=1 // pred_check_branch
      %100 = sbr.rel (0) target = $region21
    $region20: #{tpu_custom_call.1} parent=1 // pred_region
      %s102 = ssub.s32 16, 16
      %103 = vsyncadd [#allocation4], %s102
      %s105 = sshll.u32 [#allocation7], 4
      %s106 = int_to_ptr.vmem [resolvable:$true] %s105
      %108 = dma.vmem_to_hbm [thread:$0]  %s106, 16, %s2, [#allocation4]
    $region21: #{tpu_custom_call.1} parent=1 // pred_fallthru
      _
    // Predicated region
    $region22: #{tpu_custom_call.1} parent=1 // pred_check
      _
    $region23: #{tpu_custom_call.1} parent=1 // pred_check_branch
      %110 = sbr.rel (0) target = $region25
    $region24: #{tpu_custom_call.1} parent=1 // pred_region
      %111 = dma.done [#allocation4], 16
    $region25: #{tpu_custom_call.1} parent=1 // pred_fallthru
      _
    %112 = vsyncpa [#allocation3], 1
    %113 = vsyncpa [#allocation6], 1
    %114 = vsyncpa [#allocation4], 1

</llo_original>
